<compile_context>
chip_gen: v7x
topology: tpu7x:2x2x1
jax: 0.10.0
libtpu: 0.0.40
codegen_flags: <defaults>
</compile_context>

<pallas_src>
import jax
import jax.numpy as jnp
from jax.experimental import pallas as pl
from jax.experimental.pallas import tpu as pltpu

NEG_BIG = -1e30  # "minus infinity" for padded logit lanes (safe in f32, no NaN)


def _round_up(x, m):
    return (x + m - 1) // m * m


def _choose_tile(B, tile_m_max):
    """Pick (TM, B_pad): TM <= tile_m_max, multiple of 16, minimal batch padding,
    and >= 2 grid steps when there is enough work (keeps both v7x TCs busy)."""
    n_tiles = pl.cdiv(B, tile_m_max)
    if n_tiles < 2 and B > 256:          # split only if each tile still has >=128 rows
        n_tiles = 2
    tm = _round_up(pl.cdiv(B, n_tiles), 16)
    b_pad = _round_up(B, tm)
    return tm, b_pad


def classifier_kernel(x_ref, w1_ref, b1_ref, w2_ref, b2_ref,
                      w3_ref, b3_ref, w4_ref, b4_ref, o_ref):
    # f32 activation tile -> bf16 on the VPU (has slack), then MXU with f32 accumulate.
    x = x_ref[...].astype(jnp.bfloat16)
    h = jnp.dot(x, w1_ref[...], preferred_element_type=jnp.float32)
    h = jnp.maximum(h + b1_ref[...], 0.0)          # dropout(p=0.2) == identity (eval)

    h = jnp.dot(h.astype(jnp.bfloat16), w2_ref[...],
                preferred_element_type=jnp.float32)
    h = jnp.maximum(h + b2_ref[...], 0.0)

    h = jnp.dot(h.astype(jnp.bfloat16), w3_ref[...],
                preferred_element_type=jnp.float32)
    h = jnp.maximum(h + b3_ref[...], 0.0)

    # fc4 padded to 128 output lanes; padded bias entries are -1e30 so those logits
    # never win the max and contribute exp(.) == 0 to the logsumexp (all in f32).
    logits = jnp.dot(h.astype(jnp.bfloat16), w4_ref[...],
                     preferred_element_type=jnp.float32) + b4_ref[...]

    # Numerically stable log_softmax along dim=1 (f32 math, bf16 store).
    m = jnp.max(logits, axis=1, keepdims=True)
    z = logits - m
    lse = jnp.log(jnp.sum(jnp.exp(z), axis=1, keepdims=True))
    o_ref[...] = (z - lse).astype(o_ref.dtype)


def classifier_forward(x, params, *, tile_m=1024, out_dtype=jnp.bfloat16):
    """x: (B, 1, 28, 28) float32 (NCHW). Returns log-probs (B, 10)."""
    B = x.shape[0]
    x2d = x.reshape(B, -1)                         # (B, 784); reshape is free, no K pad
    K = x2d.shape[1]                               # 784
    TM, B_pad = _choose_tile(B, tile_m)
    if B_pad != B:
        x2d = jnp.pad(x2d, ((0, B_pad - B), (0, 0)))   # batch pad only (when needed)

    (w1, b1), (w2, b2), (w3, b3), (w4, b4) = params
    N_out = w4.shape[1]                            # 128 (lane-dense padded fc4)

    # Weights/biases: same block every grid step -> DMA'd once, VMEM-resident.
    resident = lambda a: pl.BlockSpec(a.shape, lambda i: (0, 0))
    in_specs = [
        pl.BlockSpec((TM, K), lambda i: (i, 0)),   # activation tile, double-buffered
        resident(w1), resident(b1),
        resident(w2), resident(b2),
        resident(w3), resident(b3),
        resident(w4), resident(b4),
    ]
    out_specs = pl.BlockSpec((TM, N_out), lambda i: (i, 0))

    flops = 2 * B_pad * (K * 256 + 256 * 128 + 128 * 64 + 64 * N_out)
    weight_bytes = int(sum(w.size * w.dtype.itemsize + b.size * b.dtype.itemsize
                           for (w, b) in params))
    bytes_accessed = (weight_bytes
                      + B_pad * K * x2d.dtype.itemsize
                      + B_pad * N_out * jnp.dtype(out_dtype).itemsize)

    out = pl.pallas_call(
        classifier_kernel,
        out_shape=jax.ShapeDtypeStruct((B_pad, N_out), out_dtype),
        grid_spec=pltpu.PrefetchScalarGridSpec(
            num_scalar_prefetch=0,
            grid=(B_pad // TM,),
            in_specs=in_specs,
            out_specs=out_specs,
        ),
        compiler_params=pltpu.CompilerParams(
            dimension_semantics=("parallel",),      # shard batch tiles across v7x's 2 TCs
            vmem_limit_bytes=48 * 1024 * 1024),     # v5e default scoped VMEM is 16 MiB
        cost_estimate=pl.CostEstimate(
            flops=flops,
            transcendentals=B_pad * (N_out + 1),    # exp over 128 lanes + log per row
            bytes_accessed=bytes_accessed),
    )(x2d, w1, b1, w2, b2, w3, b3, w4, b4)

    return out[:B, :10]


def init_params(key):
    """Deterministic params; weights stored as (in, out) = torch W.T in bf16.
    Only fc4 is padded on its output dim (10 -> 128 lanes); its padded bias
    lanes are -1e30. Biases stay f32."""
    dims = [(28 * 28, 256), (256, 128), (128, 64), (64, 10)]
    out_pads = [256, 128, 64, 128]
    params = []
    for i, ((din, dout), pout) in enumerate(zip(dims, out_pads)):
        kw, kb = jax.random.split(jax.random.fold_in(key, i))
        bound = 1.0 / jnp.sqrt(din)                # torch nn.Linear default init range
        w = jax.random.uniform(kw, (din, dout), jnp.float32, -bound, bound)
        b = jax.random.uniform(kb, (1, dout), jnp.float32, -bound, bound)
        if pout != dout:
            w = jnp.pad(w, ((0, 0), (0, pout - dout)))
            b = jnp.concatenate(
                [b, jnp.full((1, pout - dout), NEG_BIG, jnp.float32)], axis=1)
        params.append((w.astype(jnp.bfloat16), b))
    return params


def reference_forward(x, params):
    """Pure-JAX reference using the *logical* (unpadded) slices of the same
    bf16 weights + f32 biases; identical math path (bf16 dot, f32 accumulate)."""
    dims = [(784, 256), (256, 128), (128, 64), (64, 10)]
    B = x.shape[0]
    h = x.reshape(B, -1)
    for i, ((w, b), (din, dout)) in enumerate(zip(params, dims)):
        w = w[:din, :dout]
        b = b[:, :dout]
        h = jnp.dot(h.astype(jnp.bfloat16), w,
                    preferred_element_type=jnp.float32) + b
        if i < 3:
            h = jnp.maximum(h, 0.0)
    return jax.nn.log_softmax(h, axis=1)


if __name__ == "__main__":
    key = jax.random.PRNGKey(0)
    kx, kp = jax.random.split(key)
    B = 8
    x = jax.random.normal(kx, (B, 1, 28, 28), jnp.float32)   # NCHW, like torch MNIST
    params = init_params(kp)

    out = classifier_forward(x, params)
    out = jax.block_until_ready(out)

    ref = reference_forward(x, params)
    assert out.shape == (B, 10)
    out_f32 = out.astype(jnp.float32)
    # Output is stored in bf16 (lane-dense slab); internal math is f32.
    assert bool(jnp.allclose(out_f32, ref, atol=5e-2, rtol=5e-2)), "mismatch vs JAX reference"
    # log-probs must also be a valid distribution per row (bf16 rounding tolerance)
    assert bool(jnp.allclose(jnp.sum(jnp.exp(out_f32), axis=1), 1.0, atol=2e-2))
    print("KERNEL_OK")
</pallas_src>

<mosaic_0001>
module attributes {stable_mosaic.version = 11 : i64} {
  func.func @classifier_kernel(%arg0: i32, %arg1: memref<16x784xf32, #tpu.memory_space<vmem>>, %arg2: memref<784x256xbf16, #tpu.memory_space<vmem>>, %arg3: memref<1x256xf32, #tpu.memory_space<vmem>>, %arg4: memref<256x128xbf16, #tpu.memory_space<vmem>>, %arg5: memref<1x128xf32, #tpu.memory_space<vmem>>, %arg6: memref<128x64xbf16, #tpu.memory_space<vmem>>, %arg7: memref<1x64xf32, #tpu.memory_space<vmem>>, %arg8: memref<64x128xbf16, #tpu.memory_space<vmem>>, %arg9: memref<1x128xf32, #tpu.memory_space<vmem>>, %arg10: memref<16x128xbf16, #tpu.memory_space<vmem>>) attributes {dimension_semantics = [#tpu.dimension_semantics<parallel>], iteration_bounds = array<i64: 1>, scalar_prefetch = 0 : i64, scratch_operands = 0 : i64, tpu.core_type = #tpu.core_type<tc>, window_params = [{transform_indices = @transform_0, window_bounds = array<i64: 16, 784>}, {pipeline_mode = #tpu.pipeline_mode<synchronous>, transform_indices = @transform_1, window_bounds = array<i64: 784, 256>}, {pipeline_mode = #tpu.pipeline_mode<synchronous>, transform_indices = @transform_2, window_bounds = array<i64: 1, 256>}, {pipeline_mode = #tpu.pipeline_mode<synchronous>, transform_indices = @transform_3, window_bounds = array<i64: 256, 128>}, {pipeline_mode = #tpu.pipeline_mode<synchronous>, transform_indices = @transform_4, window_bounds = array<i64: 1, 128>}, {pipeline_mode = #tpu.pipeline_mode<synchronous>, transform_indices = @transform_5, window_bounds = array<i64: 128, 64>}, {pipeline_mode = #tpu.pipeline_mode<synchronous>, transform_indices = @transform_6, window_bounds = array<i64: 1, 64>}, {pipeline_mode = #tpu.pipeline_mode<synchronous>, transform_indices = @transform_7, window_bounds = array<i64: 64, 128>}, {pipeline_mode = #tpu.pipeline_mode<synchronous>, transform_indices = @transform_8, window_bounds = array<i64: 1, 128>}, {transform_indices = @transform_9, window_bounds = array<i64: 16, 128>}]} {
    %c0 = arith.constant 0 : index
    %c0_0 = arith.constant 0 : index
    %0 = vector.load %arg1[%c0, %c0_0] : memref<16x784xf32, #tpu.memory_space<vmem>>, vector<16x784xf32>
    %1 = arith.truncf %0 : vector<16x784xf32> to vector<16x784xbf16>
    %c0_1 = arith.constant 0 : index
    %c0_2 = arith.constant 0 : index
    %2 = vector.load %arg2[%c0_1, %c0_2] : memref<784x256xbf16, #tpu.memory_space<vmem>>, vector<784x256xbf16>
    %cst = arith.constant dense<0.000000e+00> : vector<16x256xf32>
    %3 = tpu.matmul %1, %2, %cst {dimension_numbers = #tpu.dot_dimension_numbers<[1], [0], [0], [1], [0, 0, 1, 1], [], []>} : vector<16x784xbf16>, vector<784x256xbf16>, vector<16x256xf32> -> vector<16x256xf32>
    %c0_3 = arith.constant 0 : index
    %c0_4 = arith.constant 0 : index
    %4 = vector.load %arg3[%c0_3, %c0_4] : memref<1x256xf32, #tpu.memory_space<vmem>>, vector<1x256xf32>
    %5 = vector.broadcast %4 : vector<1x256xf32> to vector<16x256xf32>
    %6 = arith.addf %3, %5 : vector<16x256xf32>
    %cst_5 = arith.constant 0.000000e+00 : f32
    %7 = vector.broadcast %cst_5 : f32 to vector<16x256xf32>
    %8 = arith.maximumf %6, %7 : vector<16x256xf32>
    %9 = arith.truncf %8 : vector<16x256xf32> to vector<16x256xbf16>
    %c0_6 = arith.constant 0 : index
    %c0_7 = arith.constant 0 : index
    %10 = vector.load %arg4[%c0_6, %c0_7] : memref<256x128xbf16, #tpu.memory_space<vmem>>, vector<256x128xbf16>
    %cst_8 = arith.constant dense<0.000000e+00> : vector<16x128xf32>
    %11 = tpu.matmul %9, %10, %cst_8 {dimension_numbers = #tpu.dot_dimension_numbers<[1], [0], [0], [1], [0, 0, 1, 1], [], []>} : vector<16x256xbf16>, vector<256x128xbf16>, vector<16x128xf32> -> vector<16x128xf32>
    %c0_9 = arith.constant 0 : index
    %c0_10 = arith.constant 0 : index
    %12 = vector.load %arg5[%c0_9, %c0_10] : memref<1x128xf32, #tpu.memory_space<vmem>>, vector<1x128xf32>
    %13 = vector.broadcast %12 : vector<1x128xf32> to vector<16x128xf32>
    %14 = arith.addf %11, %13 : vector<16x128xf32>
    %cst_11 = arith.constant 0.000000e+00 : f32
    %15 = vector.broadcast %cst_11 : f32 to vector<16x128xf32>
    %16 = arith.maximumf %14, %15 : vector<16x128xf32>
    %17 = arith.truncf %16 : vector<16x128xf32> to vector<16x128xbf16>
    %c0_12 = arith.constant 0 : index
    %c0_13 = arith.constant 0 : index
    %18 = vector.load %arg6[%c0_12, %c0_13] : memref<128x64xbf16, #tpu.memory_space<vmem>>, vector<128x64xbf16>
    %cst_14 = arith.constant dense<0.000000e+00> : vector<16x64xf32>
    %19 = tpu.matmul %17, %18, %cst_14 {dimension_numbers = #tpu.dot_dimension_numbers<[1], [0], [0], [1], [0, 0, 1, 1], [], []>} : vector<16x128xbf16>, vector<128x64xbf16>, vector<16x64xf32> -> vector<16x64xf32>
    %c0_15 = arith.constant 0 : index
    %c0_16 = arith.constant 0 : index
    %20 = vector.load %arg7[%c0_15, %c0_16] : memref<1x64xf32, #tpu.memory_space<vmem>>, vector<1x64xf32>
    %21 = vector.broadcast %20 : vector<1x64xf32> to vector<16x64xf32>
    %22 = arith.addf %19, %21 : vector<16x64xf32>
    %cst_17 = arith.constant 0.000000e+00 : f32
    %23 = vector.broadcast %cst_17 : f32 to vector<16x64xf32>
    %24 = arith.maximumf %22, %23 : vector<16x64xf32>
    %25 = arith.truncf %24 : vector<16x64xf32> to vector<16x64xbf16>
    %c0_18 = arith.constant 0 : index
    %c0_19 = arith.constant 0 : index
    %26 = vector.load %arg8[%c0_18, %c0_19] : memref<64x128xbf16, #tpu.memory_space<vmem>>, vector<64x128xbf16>
    %cst_20 = arith.constant dense<0.000000e+00> : vector<16x128xf32>
    %27 = tpu.matmul %25, %26, %cst_20 {dimension_numbers = #tpu.dot_dimension_numbers<[1], [0], [0], [1], [0, 0, 1, 1], [], []>} : vector<16x64xbf16>, vector<64x128xbf16>, vector<16x128xf32> -> vector<16x128xf32>
    %c0_21 = arith.constant 0 : index
    %c0_22 = arith.constant 0 : index
    %28 = vector.load %arg9[%c0_21, %c0_22] : memref<1x128xf32, #tpu.memory_space<vmem>>, vector<1x128xf32>
    %29 = vector.broadcast %28 : vector<1x128xf32> to vector<16x128xf32>
    %30 = arith.addf %27, %29 : vector<16x128xf32>
    %cst_23 = arith.constant dense<0xFF800000> : vector<16xf32>
    %31 = vector.multi_reduction <maximumf>, %30, %cst_23 [1] : vector<16x128xf32> to vector<16xf32>
    %32 = vector.shape_cast %31 : vector<16xf32> to vector<16x1xf32>
    %33 = vector.broadcast %32 : vector<16x1xf32> to vector<16x128xf32>
    %34 = arith.subf %30, %33 : vector<16x128xf32>
    %35 = math.exp %34 : vector<16x128xf32>
    %cst_24 = arith.constant dense<0.000000e+00> : vector<16xf32>
    %36 = vector.multi_reduction <add>, %35, %cst_24 [1] : vector<16x128xf32> to vector<16xf32>
    %37 = vector.shape_cast %36 : vector<16xf32> to vector<16x1xf32>
    %38 = math.log %37 : vector<16x1xf32>
    %39 = vector.broadcast %38 : vector<16x1xf32> to vector<16x128xf32>
    %40 = arith.subf %34, %39 : vector<16x128xf32>
    %41 = arith.truncf %40 : vector<16x128xf32> to vector<16x128xbf16>
    %c0_25 = arith.constant 0 : index
    %c0_26 = arith.constant 0 : index
    %42 = vector.load %arg10[%c0_25, %c0_26] : memref<16x128xbf16, #tpu.memory_space<vmem>>, vector<16x128xbf16>
    tpu.vector_store %arg10[%c0_25, %c0_26], %41 {strides = array<i32>} : memref<16x128xbf16, #tpu.memory_space<vmem>>, vector<16x128xbf16>,
    return
  }
  func.func @transform_0(%arg0: i32) -> (i32, i32) {
    %c0_i32 = arith.constant 0 : i32
    %c0_i32_0 = arith.constant 0 : i32
    return %arg0, %c0_i32 : i32, i32
  }
  func.func @transform_1(%arg0: i32) -> (i32, i32) {
    %c0_i32 = arith.constant 0 : i32
    %c0_i32_0 = arith.constant 0 : i32
    %c0_i32_1 = arith.constant 0 : i32
    return %c0_i32, %c0_i32_0 : i32, i32
  }
  func.func @transform_2(%arg0: i32) -> (i32, i32) {
    %c0_i32 = arith.constant 0 : i32
    %c0_i32_0 = arith.constant 0 : i32
    %c0_i32_1 = arith.constant 0 : i32
    return %c0_i32, %c0_i32_0 : i32, i32
  }
  func.func @transform_3(%arg0: i32) -> (i32, i32) {
    %c0_i32 = arith.constant 0 : i32
    %c0_i32_0 = arith.constant 0 : i32
    %c0_i32_1 = arith.constant 0 : i32
    return %c0_i32, %c0_i32_0 : i32, i32
  }
  func.func @transform_4(%arg0: i32) -> (i32, i32) {
    %c0_i32 = arith.constant 0 : i32
    %c0_i32_0 = arith.constant 0 : i32
    %c0_i32_1 = arith.constant 0 : i32
    return %c0_i32, %c0_i32_0 : i32, i32
  }
  func.func @transform_5(%arg0: i32) -> (i32, i32) {
    %c0_i32 = arith.constant 0 : i32
    %c0_i32_0 = arith.constant 0 : i32
    %c0_i32_1 = arith.constant 0 : i32
    return %c0_i32, %c0_i32_0 : i32, i32
  }
  func.func @transform_6(%arg0: i32) -> (i32, i32) {
    %c0_i32 = arith.constant 0 : i32
    %c0_i32_0 = arith.constant 0 : i32
    %c0_i32_1 = arith.constant 0 : i32
    return %c0_i32, %c0_i32_0 : i32, i32
  }
  func.func @transform_7(%arg0: i32) -> (i32, i32) {
    %c0_i32 = arith.constant 0 : i32
    %c0_i32_0 = arith.constant 0 : i32
    %c0_i32_1 = arith.constant 0 : i32
    return %c0_i32, %c0_i32_0 : i32, i32
  }
  func.func @transform_8(%arg0: i32) -> (i32, i32) {
    %c0_i32 = arith.constant 0 : i32
    %c0_i32_0 = arith.constant 0 : i32
    %c0_i32_1 = arith.constant 0 : i32
    return %c0_i32, %c0_i32_0 : i32, i32
  }
  func.func @transform_9(%arg0: i32) -> (i32, i32) {
    %c0_i32 = arith.constant 0 : i32
    %c0_i32_0 = arith.constant 0 : i32
    return %arg0, %c0_i32 : i32, i32
  }
}

</mosaic_0001>

<llo_original>
// kernel: tpu_custom_call.1
$region0: #{tpu_custom_call.1}
  #allocation0 [shape = 'u32[]', space=smem, size = 0x4, offset = 0x4, fixed_abs, tag = 'smem constant byte address 0x4 - core index']
  #allocation1 [shape = 'u32[144,128]{1,0:T(1,128)}', space=vmem, size = 0x12000, scoped, tag = 'internal scratch']
  %s0 = inlined_call_operand.hbm [shape: f32[16,784], index: 0, kind: input, shape index: {}]
  %s1 = inlined_call_operand.hbm [shape: bf16[784,256], index: 1, kind: input, shape index: {}]
  %s2 = inlined_call_operand.vmem [shape: f32[1,256], index: 2, kind: input, shape index: {}]
  %s3 = inlined_call_operand.hbm [shape: bf16[256,128], index: 3, kind: input, shape index: {}]
  %s4 = inlined_call_operand.vmem [shape: f32[1,128], index: 4, kind: input, shape index: {}]
  %s5 = inlined_call_operand.vmem [shape: bf16[128,64], index: 5, kind: input, shape index: {}]
  %s6 = inlined_call_operand.vmem [shape: f32[1,64], index: 6, kind: input, shape index: {}]
  %s7 = inlined_call_operand.vmem [shape: bf16[64,128], index: 7, kind: input, shape index: {}]
  %s8 = inlined_call_operand.vmem [shape: f32[1,128], index: 8, kind: input, shape index: {}]
  %s9 = inlined_call_operand.hbm [shape: bf16[16,128], index: 9, kind: output, shape index: {}]
  %s10 = sld [smem:[#allocation0]]
  $region58: #{tpu_custom_call.1} parent=0
    _
  %s12 = ssub.s32 1, %s10
  %s13 = scalar_select 0, %s12, %s10
  $region1: #{tpu_custom_call.1} parent=0
    #allocation2 [shape = 'u8[57344]{0}', space=vmem, size = 0xe000, scoped, tag = 'input window, operand 0, single buffered']
    #allocation3 [shape = 's32[1]{0}', space=sflag, size = 0x4, scoped, tag = 'scoped memory for tpu_custom_call.1']
    #allocation4 [shape = 's32[1]{0}', space=sflag, size = 0x4, scoped, tag = 'scoped memory for tpu_custom_call.1']
    #allocation5 [shape = 'u8[401408]{0}', space=vmem, size = 0x62000, scoped, tag = 'input window, operand 1, single buffered']
    #allocation6 [shape = 's32[1]{0}', space=sflag, size = 0x4, scoped, tag = 'scoped memory for tpu_custom_call.1']
    #allocation7 [shape = 'u8[65536]{0}', space=vmem, size = 0x10000, scoped, tag = 'input window, operand 3, single buffered']
    #allocation8 [shape = 'u8[4096]{0}', space=vmem, size = 0x1000, scoped, tag = 'output window, operand 0, single buffered']
    %14 = vsyncpa [#allocation3], 0
    %15 = vsyncpa [#allocation6], 0
    %16 = vsyncpa [#allocation4], 0
    // Predicated region
    $region2: #{tpu_custom_call.1} parent=1 // pred_check
      _
    $region3: #{tpu_custom_call.1} parent=1 // pred_check_branch
      %18 = sbr.rel (0) target = $region5
    $region4: #{tpu_custom_call.1} parent=1 // pred_region
      %s20 = ssub.s32 1792, 1792
      %21 = vsyncadd [#allocation3], %s20
      %s22 = sshll.u32 [#allocation2], 4
      %s23 = int_to_ptr.vmem [resolvable:$true] %s22
      %28 = dma.hbm_to_vmem [thread:$0]  %s0, 1792, %s23, [#allocation3], 896, 896, 56
    $region5: #{tpu_custom_call.1} parent=1 // pred_fallthru
      _
    // Predicated region
    $region6: #{tpu_custom_call.1} parent=1 // pred_check
      _
    $region7: #{tpu_custom_call.1} parent=1 // pred_check_branch
      %30 = sbr.rel (0) target = $region9
    $region8: #{tpu_custom_call.1} parent=1 // pred_region
      %s32 = ssub.s32 12544, 12544
      %33 = vsyncadd [#allocation6], %s32
      %s34 = sshll.u32 [#allocation5], 4
      %s35 = int_to_ptr.vmem [resolvable:$true] %s34
      %40 = dma.hbm_to_vmem [thread:$0]  %s1, 12544, %s35, [#allocation6], 128, 128, 8
    $region9: #{tpu_custom_call.1} parent=1 // pred_fallthru
      _
    // Predicated region
    $region10: #{tpu_custom_call.1} parent=1 // pred_check
      _
    $region11: #{tpu_custom_call.1} parent=1 // pred_check_branch
      %42 = sbr.rel (0) target = $region13
    $region12: #{tpu_custom_call.1} parent=1 // pred_region
      _
    $region13: #{tpu_custom_call.1} parent=1 // pred_fallthru
      _
    // Predicated region
    $region14: #{tpu_custom_call.1} parent=1 // pred_check
      _
    $region15: #{tpu_custom_call.1} parent=1 // pred_check_branch
      %44 = sbr.rel (0) target = $region17
    $region16: #{tpu_custom_call.1} parent=1 // pred_region
      %s46 = ssub.s32 2048, 2048
      %47 = vsyncadd [#allocation6], %s46
      %s48 = sshll.u32 [#allocation7], 4
      %s49 = int_to_ptr.vmem [resolvable:$true] %s48
      %54 = dma.hbm_to_vmem [thread:$0]  %s3, 2048, %s49, [#allocation6], 64, 64, 4
    $region17: #{tpu_custom_call.1} parent=1 // pred_fallthru
      _
    // Predicated region
    $region18: #{tpu_custom_call.1} parent=1 // pred_check
      _
    $region19: #{tpu_custom_call.1} parent=1 // pred_check_branch
      %56 = sbr.rel (0) target = $region21
    $region20: #{tpu_custom_call.1} parent=1 // pred_region
      _
    $region21: #{tpu_custom_call.1} parent=1 // pred_fallthru
      _
    // Predicated region
    $region22: #{tpu_custom_call.1} parent=1 // pred_check
      _
    $region23: #{tpu_custom_call.1} parent=1 // pred_check_branch
      %58 = sbr.rel (0) target = $region25
    $region24: #{tpu_custom_call.1} parent=1 // pred_region
      _
    $region25: #{tpu_custom_call.1} parent=1 // pred_fallthru
      _
    // Predicated region
    $region26: #{tpu_custom_call.1} parent=1 // pred_check
      _
    $region27: #{tpu_custom_call.1} parent=1 // pred_check_branch
      %60 = sbr.rel (0) target = $region29
    $region28: #{tpu_custom_call.1} parent=1 // pred_region
      _
    $region29: #{tpu_custom_call.1} parent=1 // pred_fallthru
      _
    // Predicated region
    $region30: #{tpu_custom_call.1} parent=1 // pred_check
      _
    $region31: #{tpu_custom_call.1} parent=1 // pred_check_branch
      %62 = sbr.rel (0) target = $region33
    $region32: #{tpu_custom_call.1} parent=1 // pred_region
      _
    $region33: #{tpu_custom_call.1} parent=1 // pred_fallthru
      _
    // Predicated region
    $region34: #{tpu_custom_call.1} parent=1 // pred_check
      _
    $region35: #{tpu_custom_call.1} parent=1 // pred_check_branch
      %64 = sbr.rel (0) target = $region37
    $region36: #{tpu_custom_call.1} parent=1 // pred_region
      _
    $region37: #{tpu_custom_call.1} parent=1 // pred_fallthru
      _
    // Predicated region
    $region38: #{tpu_custom_call.1} parent=1 // pred_check
      _
    $region39: #{tpu_custom_call.1} parent=1 // pred_check_branch
      %66 = sbr.rel (0) target = $region41
    $region40: #{tpu_custom_call.1} parent=1 // pred_region
      %67 = dma.done [#allocation3], 1792
    $region41: #{tpu_custom_call.1} parent=1 // pred_fallthru
      _
    // Predicated region
    $region42: #{tpu_custom_call.1} parent=1 // pred_check
      _
    $region43: #{tpu_custom_call.1} parent=1 // pred_check_branch
      %69 = sbr.rel (0) target = $region45
    $region44: #{tpu_custom_call.1} parent=1 // pred_region
      %70 = dma.done [#allocation6], 12544
    $region45: #{tpu_custom_call.1} parent=1 // pred_fallthru
      _
    // Predicated region
    $region46: #{tpu_custom_call.1} parent=1 // pred_check
      _
    $region47: #{tpu_custom_call.1} parent=1 // pred_check_branch
      %72 = sbr.rel (0) target = $region49
    $region48: #{tpu_custom_call.1} parent=1 // pred_region
      %73 = dma.done [#allocation6], 2048
    $region49: #{tpu_custom_call.1} parent=1 // pred_fallthru
      _
    %v75 = vld [vmem:[#allocation2] sm:$0xff]
    %v76 = vld [vmem:[#allocation2 + $0x8] sm:$0xff]
    %v77 = vld [vmem:[#allocation2 + $0x10] sm:$0xff]
    %v78 = vld [vmem:[#allocation2 + $0x18] sm:$0xff]
    %v79 = vld [vmem:[#allocation2 + $0x20] sm:$0xff]
    %v80 = vld [vmem:[#allocation2 + $0x28] sm:$0xff]
    %v81 = vld [vmem:[#allocation2 + $0x30] sm:$0xff]
    %v82 = vld [vmem:[#allocation2 + $0x38] sm:$0xff]
    %v83 = vld [vmem:[#allocation2 + $0x40] sm:$0xff]
    %v84 = vld [vmem:[#allocation2 + $0x48] sm:$0xff]
    %v85 = vld [vmem:[#allocation2 + $0x50] sm:$0xff]
    %v86 = vld [vmem:[#allocation2 + $0x58] sm:$0xff]
    %v87 = vld [vmem:[#allocation2 + $0x60] sm:$0xff]
    %v88 = vld [vmem:[#allocation2 + $0x68] sm:$0xff]
    %v89 = vpack.c.bf16 %v82, %v75
    %v90 = vpack.c.bf16 %v83, %v76
    %v91 = vpack.c.bf16 %v84, %v77
    %v92 = vpack.c.bf16 %v85, %v78
    %v93 = vpack.c.bf16 %v86, %v79
    %v94 = vpack.c.bf16 %v87, %v80
    %v95 = vpack.c.bf16 %v88, %v81
    %v96 = vld [vmem:[#allocation5] sm:$0xff]
    %v97 = vld [vmem:[#allocation5 + $0x8] sm:$0xff]
    %v98 = vld [vmem:[#allocation5 + $0x10] sm:$0xff]
    %v99 = vld [vmem:[#allocation5 + $0x18] sm:$0xff]
    %v100 = vld [vmem:[#allocation5 + $0x20] sm:$0xff]
    %v101 = vld [vmem:[#allocation5 + $0x28] sm:$0xff]
    %v102 = vld [vmem:[#allocation5 + $0x30] sm:$0xff]
    %v103 = vld [vmem:[#allocation5 + $0x38] sm:$0xff]
    %v104 = vld [vmem:[#allocation5 + $0x40] sm:$0xff]
    %v105 = vld [vmem:[#allocation5 + $0x48] sm:$0xff]
    %v106 = vld [vmem:[#allocation5 + $0x50] sm:$0xff]
    %v107 = vld [vmem:[#allocation5 + $0x58] sm:$0xff]
    %v108 = vld [vmem:[#allocation5 + $0x60] sm:$0xff]
    %v109 = vld [vmem:[#allocation5 + $0x68] sm:$0xff]
    %v110 = vld [vmem:[#allocation5 + $0x70] sm:$0xff]
    %v111 = vld [vmem:[#allocation5 + $0x78] sm:$0xff]
    %v112 = vld [vmem:[#allocation5 + $0x80] sm:$0xff]
    %v113 = vld [vmem:[#allocation5 + $0x88] sm:$0xff]
    %v114 = vld [vmem:[#allocation5 + $0x90] sm:$0xff]
    %v115 = vld [vmem:[#allocation5 + $0x98] sm:$0xff]
    %v116 = vld [vmem:[#allocation5 + $0xa0] sm:$0xff]
    %v117 = vld [vmem:[#allocation5 + $0xa8] sm:$0xff]
    %v118 = vld [vmem:[#allocation5 + $0xb0] sm:$0xff]
    %v119 = vld [vmem:[#allocation5 + $0xb8] sm:$0xff]
    %v120 = vld [vmem:[#allocation5 + $0xc0] sm:$0xff]
    %v121 = vld [vmem:[#allocation5 + $0xc8] sm:$0xff]
    %v122 = vld [vmem:[#allocation5 + $0xd0] sm:$0xff]
    %v123 = vld [vmem:[#allocation5 + $0xd8] sm:$0xff]
    %v124 = vld [vmem:[#allocation5 + $0xe0] sm:$0xff]
    %v125 = vld [vmem:[#allocation5 + $0xe8] sm:$0xff]
    %v126 = vld [vmem:[#allocation5 + $0xf0] sm:$0xff]
    %v127 = vld [vmem:[#allocation5 + $0xf8] sm:$0xff]
    %v128 = vld [vmem:[#allocation5 + $0x100] sm:$0xff]
    %v129 = vld [vmem:[#allocation5 + $0x108] sm:$0xff]
    %v130 = vld [vmem:[#allocation5 + $0x110] sm:$0xff]
    %v131 = vld [vmem:[#allocation5 + $0x118] sm:$0xff]
    %v132 = vld [vmem:[#allocation5 + $0x120] sm:$0xff]
    %v133 = vld [vmem:[#allocation5 + $0x128] sm:$0xff]
    %v134 = vld [vmem:[#allocation5 + $0x130] sm:$0xff]
    %v135 = vld [vmem:[#allocation5 + $0x138] sm:$0xff]
    %v136 = vld [vmem:[#allocation5 + $0x140] sm:$0xff]
    %v137 = vld [vmem:[#allocation5 + $0x148] sm:$0xff]
    %v138 = vld [vmem:[#allocation5 + $0x150] sm:$0xff]
    %v139 = vld [vmem:[#allocation5 + $0x158] sm:$0xff]
    %v140 = vld [vmem:[#allocation5 + $0x160] sm:$0xff]
    %v141 = vld [vmem:[#allocation5 + $0x168] sm:$0xff]
    %v142 = vld [vmem:[#allocation5 + $0x170] sm:$0xff]
    %v143 = vld [vmem:[#allocation5 + $0x178] sm:$0xff]
    %v144 = vld [vmem:[#allocation5 + $0x180] sm:$0xff]
    %v145 = vld [vmem:[#allocation5 + $0x188] sm:$0xff]
    %v146 = vld [vmem:[#allocation5 + $0x190] sm:$0xff]
    %v147 = vld [vmem:[#allocation5 + $0x198] sm:$0xff]
    %v148 = vld [vmem:[#allocation5 + $0x1a0] sm:$0xff]
    %v149 = vld [vmem:[#allocation5 + $0x1a8] sm:$0xff]
    %v150 = vld [vmem:[#allocation5 + $0x1b0] sm:$0xff]
    %v151 = vld [vmem:[#allocation5 + $0x1b8] sm:$0xff]
    %v152 = vld [vmem:[#allocation5 + $0x1c0] sm:$0xff]
    %v153 = vld [vmem:[#allocation5 + $0x1c8] sm:$0xff]
    %v154 = vld [vmem:[#allocation5 + $0x1d0] sm:$0xff]
    %v155 = vld [vmem:[#allocation5 + $0x1d8] sm:$0xff]
    %v156 = vld [vmem:[#allocation5 + $0x1e0] sm:$0xff]
    %v157 = vld [vmem:[#allocation5 + $0x1e8] sm:$0xff]
    %v158 = vld [vmem:[#allocation5 + $0x1f0] sm:$0xff]
    %v159 = vld [vmem:[#allocation5 + $0x1f8] sm:$0xff]
    %v160 = vld [vmem:[#allocation5 + $0x200] sm:$0xff]
    %v161 = vld [vmem:[#allocation5 + $0x208] sm:$0xff]
    %v162 = vld [vmem:[#allocation5 + $0x210] sm:$0xff]
    %v163 = vld [vmem:[#allocation5 + $0x218] sm:$0xff]
    %v164 = vld [vmem:[#allocation5 + $0x220] sm:$0xff]
    %v165 = vld [vmem:[#allocation5 + $0x228] sm:$0xff]
    %v166 = vld [vmem:[#allocation5 + $0x230] sm:$0xff]
    %v167 = vld [vmem:[#allocation5 + $0x238] sm:$0xff]
    %v168 = vld [vmem:[#allocation5 + $0x240] sm:$0xff]
    %v169 = vld [vmem:[#allocation5 + $0x248] sm:$0xff]
    %v170 = vld [vmem:[#allocation5 + $0x250] sm:$0xff]
    %v171 = vld [vmem:[#allocation5 + $0x258] sm:$0xff]
    %v172 = vld [vmem:[#allocation5 + $0x260] sm:$0xff]
    %v173 = vld [vmem:[#allocation5 + $0x268] sm:$0xff]
    %v174 = vld [vmem:[#allocation5 + $0x270] sm:$0xff]
    %v175 = vld [vmem:[#allocation5 + $0x278] sm:$0xff]
    %v176 = vld [vmem:[#allocation5 + $0x280] sm:$0xff]
    %v177 = vld [vmem:[#allocation5 + $0x288] sm:$0xff]
    %v178 = vld [vmem:[#allocation5 + $0x290] sm:$0xff]
    %v179 = vld [vmem:[#allocation5 + $0x298] sm:$0xff]
    %v180 = vld [vmem:[#allocation5 + $0x2a0] sm:$0xff]
    %v181 = vld [vmem:[#allocation5 + $0x2a8] sm:$0xff]
    %v182 = vld [vmem:[#allocation5 + $0x2b0] sm:$0xff]
    %v183 = vld [vmem:[#allocation5 + $0x2b8] sm:$0xff]
    %v184 = vld [vmem:[#allocation5 + $0x2c0] sm:$0xff]
    %v185 = vld [vmem:[#allocation5 + $0x2c8] sm:$0xff]
    %v186 = vld [vmem:[#allocation5 + $0x2d0] sm:$0xff]
    %v187 = vld [vmem:[#allocation5 + $0x2d8] sm:$0xff]
    %v188 = vld [vmem:[#allocation5 + $0x2e0] sm:$0xff]
    %v189 = vld [vmem:[#allocation5 + $0x2e8] sm:$0xff]
    %v190 = vld [vmem:[#allocation5 + $0x2f0] sm:$0xff]
    %v191 = vld [vmem:[#allocation5 + $0x2f8] sm:$0xff]
    %v192 = vld [vmem:[#allocation5 + $0x300] sm:$0xff]
    %v193 = vld [vmem:[#allocation5 + $0x308] sm:$0xff]
    %v194 = vld [vmem:[%s2] sm:$0x3]
    %v196 = vlaneseq
    %v197 = vshrl.u32 %v196, 7
    %v198 = vsub.s32 0, %v197
    %v199 = vrot.slane %v194, %v198
    %v200 = vlaneseq
    %v201 = vshrl.u32 %v200, 7
    %v202 = vsub.s32 1, %v201
    %v203 = vrot.slane %v194, %v202
    %v304 = vunpack.c.l.b16 %v96
    %v305 = vunpack.c.h.b16 %v96
    %v306 = vunpack.c.l.b16 %v97
    %v307 = vunpack.c.h.b16 %v97
    %v308 = vunpack.c.l.b16 %v98
    %v309 = vunpack.c.h.b16 %v98
    %v310 = vunpack.c.l.b16 %v99
    %v311 = vunpack.c.h.b16 %v99
    %v312 = vunpack.c.l.b16 %v100
    %v313 = vunpack.c.h.b16 %v100
    %v314 = vunpack.c.l.b16 %v101
    %v315 = vunpack.c.h.b16 %v101
    %v316 = vunpack.c.l.b16 %v102
    %v317 = vunpack.c.h.b16 %v102
    %v318 = vunpack.c.l.b16 %v103
    %v319 = vunpack.c.h.b16 %v103
    %v320 = vunpack.c.l.b16 %v104
    %v321 = vunpack.c.h.b16 %v104
    %v322 = vunpack.c.l.b16 %v105
    %v323 = vunpack.c.h.b16 %v105
    %v324 = vunpack.c.l.b16 %v106
    %v325 = vunpack.c.h.b16 %v106
    %v326 = vunpack.c.l.b16 %v107
    %v327 = vunpack.c.h.b16 %v107
    %v328 = vunpack.c.l.b16 %v108
    %v329 = vunpack.c.h.b16 %v108
    %v330 = vunpack.c.l.b16 %v109
    %v331 = vunpack.c.h.b16 %v109
    %v332 = vunpack.c.l.b16 %v110
    %v333 = vunpack.c.h.b16 %v110
    %v334 = vunpack.c.l.b16 %v111
    %v335 = vunpack.c.h.b16 %v111
    %v336 = vunpack.c.l.b16 %v112
    %v337 = vunpack.c.h.b16 %v112
    %v338 = vunpack.c.l.b16 %v113
    %v339 = vunpack.c.h.b16 %v113
    %v340 = vunpack.c.l.b16 %v114
    %v341 = vunpack.c.h.b16 %v114
    %v342 = vunpack.c.l.b16 %v115
    %v343 = vunpack.c.h.b16 %v115
    %v344 = vunpack.c.l.b16 %v116
    %v345 = vunpack.c.h.b16 %v116
    %v346 = vunpack.c.l.b16 %v117
    %v347 = vunpack.c.h.b16 %v117
    %v348 = vunpack.c.l.b16 %v118
    %v349 = vunpack.c.h.b16 %v118
    %v350 = vunpack.c.l.b16 %v119
    %v351 = vunpack.c.h.b16 %v119
    %v352 = vunpack.c.l.b16 %v120
    %v353 = vunpack.c.h.b16 %v120
    %v354 = vunpack.c.l.b16 %v121
    %v355 = vunpack.c.h.b16 %v121
    %v356 = vunpack.c.l.b16 %v122
    %v357 = vunpack.c.h.b16 %v122
    %v358 = vunpack.c.l.b16 %v123
    %v359 = vunpack.c.h.b16 %v123
    %v360 = vunpack.c.l.b16 %v124
    %v361 = vunpack.c.h.b16 %v124
    %v362 = vunpack.c.l.b16 %v125
    %v363 = vunpack.c.h.b16 %v125
    %v364 = vunpack.c.l.b16 %v126
    %v365 = vunpack.c.h.b16 %v126
    %v366 = vunpack.c.l.b16 %v127
    %v367 = vunpack.c.h.b16 %v127
    %v368 = vunpack.c.l.b16 %v128
    %v369 = vunpack.c.h.b16 %v128
    %v370 = vunpack.c.l.b16 %v129
    %v371 = vunpack.c.h.b16 %v129
    %v372 = vunpack.c.l.b16 %v130
    %v373 = vunpack.c.h.b16 %v130
    %v374 = vunpack.c.l.b16 %v131
    %v375 = vunpack.c.h.b16 %v131
    %v376 = vunpack.c.l.b16 %v132
    %v377 = vunpack.c.h.b16 %v132
    %v378 = vunpack.c.l.b16 %v133
    %v379 = vunpack.c.h.b16 %v133
    %v380 = vunpack.c.l.b16 %v134
    %v381 = vunpack.c.h.b16 %v134
    %v382 = vunpack.c.l.b16 %v135
    %v383 = vunpack.c.h.b16 %v135
    %v384 = vunpack.c.l.b16 %v136
    %v385 = vunpack.c.h.b16 %v136
    %v386 = vunpack.c.l.b16 %v137
    %v387 = vunpack.c.h.b16 %v137
    %v388 = vunpack.c.l.b16 %v138
    %v389 = vunpack.c.h.b16 %v138
    %v390 = vunpack.c.l.b16 %v139
    %v391 = vunpack.c.h.b16 %v139
    %v392 = vunpack.c.l.b16 %v140
    %v393 = vunpack.c.h.b16 %v140
    %v394 = vunpack.c.l.b16 %v141
    %v395 = vunpack.c.h.b16 %v141
    %v396 = vunpack.c.l.b16 %v142
    %v397 = vunpack.c.h.b16 %v142
    %v398 = vunpack.c.l.b16 %v143
    %v399 = vunpack.c.h.b16 %v143
    %v400 = vunpack.c.l.b16 %v144
    %v401 = vunpack.c.h.b16 %v144
    %v402 = vunpack.c.l.b16 %v145
    %v403 = vunpack.c.h.b16 %v145
    %v404 = vunpack.c.l.b16 %v146
    %v405 = vunpack.c.h.b16 %v146
    %v406 = vunpack.c.l.b16 %v147
    %v407 = vunpack.c.h.b16 %v147
    %v408 = vunpack.c.l.b16 %v148
    %v409 = vunpack.c.h.b16 %v148
    %v410 = vunpack.c.l.b16 %v149
    %v411 = vunpack.c.h.b16 %v149
    %v412 = vunpack.c.l.b16 %v150
    %v413 = vunpack.c.h.b16 %v150
    %v414 = vunpack.c.l.b16 %v151
    %v415 = vunpack.c.h.b16 %v151
    %v416 = vunpack.c.l.b16 %v152
    %v417 = vunpack.c.h.b16 %v152
    %v418 = vunpack.c.l.b16 %v153
    %v419 = vunpack.c.h.b16 %v153
    %v420 = vunpack.c.l.b16 %v154
    %v421 = vunpack.c.h.b16 %v154
    %v422 = vunpack.c.l.b16 %v155
    %v423 = vunpack.c.h.b16 %v155
    %v424 = vunpack.c.l.b16 %v156
    %v425 = vunpack.c.h.b16 %v156
    %v426 = vunpack.c.l.b16 %v157
    %v427 = vunpack.c.h.b16 %v157
    %v428 = vunpack.c.l.b16 %v158
    %v429 = vunpack.c.h.b16 %v158
    %v430 = vunpack.c.l.b16 %v159
    %v431 = vunpack.c.h.b16 %v159
    %v432 = vunpack.c.l.b16 %v160
    %v433 = vunpack.c.h.b16 %v160
    %v434 = vunpack.c.l.b16 %v161
    %v435 = vunpack.c.h.b16 %v161
    %v436 = vunpack.c.l.b16 %v162
    %v437 = vunpack.c.h.b16 %v162
    %v438 = vunpack.c.l.b16 %v163
    %v439 = vunpack.c.h.b16 %v163
    %v440 = vunpack.c.l.b16 %v164
    %v441 = vunpack.c.h.b16 %v164
    %v442 = vunpack.c.l.b16 %v165
    %v443 = vunpack.c.h.b16 %v165
    %v444 = vunpack.c.l.b16 %v166
    %v445 = vunpack.c.h.b16 %v166
    %v446 = vunpack.c.l.b16 %v167
    %v447 = vunpack.c.h.b16 %v167
    %v448 = vunpack.c.l.b16 %v168
    %v449 = vunpack.c.h.b16 %v168
    %v450 = vunpack.c.l.b16 %v169
    %v451 = vunpack.c.h.b16 %v169
    %v452 = vunpack.c.l.b16 %v170
    %v453 = vunpack.c.h.b16 %v170
    %v454 = vunpack.c.l.b16 %v171
    %v455 = vunpack.c.h.b16 %v171
    %v456 = vunpack.c.l.b16 %v172
    %v457 = vunpack.c.h.b16 %v172
    %v458 = vunpack.c.l.b16 %v173
    %v459 = vunpack.c.h.b16 %v173
    %v460 = vunpack.c.l.b16 %v174
    %v461 = vunpack.c.h.b16 %v174
    %v462 = vunpack.c.l.b16 %v175
    %v463 = vunpack.c.h.b16 %v175
    %v464 = vunpack.c.l.b16 %v176
    %v465 = vunpack.c.h.b16 %v176
    %v466 = vunpack.c.l.b16 %v177
    %v467 = vunpack.c.h.b16 %v177
    %v468 = vunpack.c.l.b16 %v178
    %v469 = vunpack.c.h.b16 %v178
    %v470 = vunpack.c.l.b16 %v179
    %v471 = vunpack.c.h.b16 %v179
    %v472 = vunpack.c.l.b16 %v180
    %v473 = vunpack.c.h.b16 %v180
    %v474 = vunpack.c.l.b16 %v181
    %v475 = vunpack.c.h.b16 %v181
    %v476 = vunpack.c.l.b16 %v182
    %v477 = vunpack.c.h.b16 %v182
    %v478 = vunpack.c.l.b16 %v183
    %v479 = vunpack.c.h.b16 %v183
    %v480 = vunpack.c.l.b16 %v184
    %v481 = vunpack.c.h.b16 %v184
    %v482 = vunpack.c.l.b16 %v185
    %v483 = vunpack.c.h.b16 %v185
    %v484 = vunpack.c.l.b16 %v186
    %v485 = vunpack.c.h.b16 %v186
    %v486 = vunpack.c.l.b16 %v187
    %v487 = vunpack.c.h.b16 %v187
    %v488 = vunpack.c.l.b16 %v188
    %v489 = vunpack.c.h.b16 %v188
    %v490 = vunpack.c.l.b16 %v189
    %v491 = vunpack.c.h.b16 %v189
    %v492 = vunpack.c.l.b16 %v190
    %v493 = vunpack.c.h.b16 %v190
    %v494 = vunpack.c.l.b16 %v191
    %v495 = vunpack.c.h.b16 %v191
    %v496 = vunpack.c.l.b16 %v192
    %v497 = vunpack.c.h.b16 %v192
    %v498 = vunpack.c.l.b16 %v193
    %v499 = vunpack.c.h.b16 %v193
    %v500 = vpack.c.b16 %v306, %v304
    %v501 = vpack.c.b16 %v307, %v305
    %v502 = vpack.c.b16 %v310, %v308
    %v503 = vpack.c.b16 %v311, %v309
    %v504 = vpack.c.b16 %v314, %v312
    %v505 = vpack.c.b16 %v315, %v313
    %v506 = vpack.c.b16 %v318, %v316
    %v507 = vpack.c.b16 %v319, %v317
    %v508 = vpack.c.b16 %v322, %v320
    %v509 = vpack.c.b16 %v323, %v321
    %v510 = vpack.c.b16 %v326, %v324
    %v511 = vpack.c.b16 %v327, %v325
    %v512 = vpack.c.b16 %v330, %v328
    %v513 = vpack.c.b16 %v331, %v329
    %v514 = vpack.c.b16 %v334, %v332
    %v515 = vpack.c.b16 %v335, %v333
    %v516 = vpack.c.b16 %v338, %v336
    %v517 = vpack.c.b16 %v339, %v337
    %v518 = vpack.c.b16 %v342, %v340
    %v519 = vpack.c.b16 %v343, %v341
    %v520 = vpack.c.b16 %v346, %v344
    %v521 = vpack.c.b16 %v347, %v345
    %v522 = vpack.c.b16 %v350, %v348
    %v523 = vpack.c.b16 %v351, %v349
    %v524 = vpack.c.b16 %v354, %v352
    %v525 = vpack.c.b16 %v355, %v353
    %v526 = vpack.c.b16 %v358, %v356
    %v527 = vpack.c.b16 %v359, %v357
    %v528 = vpack.c.b16 %v362, %v360
    %v529 = vpack.c.b16 %v363, %v361
    %v530 = vpack.c.b16 %v366, %v364
    %v531 = vpack.c.b16 %v367, %v365
    %v532 = vpack.c.b16 %v370, %v368
    %v533 = vpack.c.b16 %v371, %v369
    %v534 = vpack.c.b16 %v374, %v372
    %v535 = vpack.c.b16 %v375, %v373
    %v536 = vpack.c.b16 %v378, %v376
    %v537 = vpack.c.b16 %v379, %v377
    %v538 = vpack.c.b16 %v382, %v380
    %v539 = vpack.c.b16 %v383, %v381
    %v540 = vpack.c.b16 %v386, %v384
    %v541 = vpack.c.b16 %v387, %v385
    %v542 = vpack.c.b16 %v390, %v388
    %v543 = vpack.c.b16 %v391, %v389
    %v544 = vpack.c.b16 %v394, %v392
    %v545 = vpack.c.b16 %v395, %v393
    %v546 = vpack.c.b16 %v398, %v396
    %v547 = vpack.c.b16 %v399, %v397
    %v548 = vpack.c.b16 %v402, %v400
    %v549 = vpack.c.b16 %v403, %v401
    %v550 = vpack.c.b16 %v406, %v404
    %v551 = vpack.c.b16 %v407, %v405
    %v552 = vpack.c.b16 %v410, %v408
    %v553 = vpack.c.b16 %v411, %v409
    %v554 = vpack.c.b16 %v414, %v412
    %v555 = vpack.c.b16 %v415, %v413
    %v556 = vpack.c.b16 %v418, %v416
    %v557 = vpack.c.b16 %v419, %v417
    %v558 = vpack.c.b16 %v422, %v420
    %v559 = vpack.c.b16 %v423, %v421
    %v560 = vpack.c.b16 %v426, %v424
    %v561 = vpack.c.b16 %v427, %v425
    %v562 = vpack.c.b16 %v430, %v428
    %v563 = vpack.c.b16 %v431, %v429
    %v564 = vpack.c.b16 %v434, %v432
    %v565 = vpack.c.b16 %v435, %v433
    %v566 = vpack.c.b16 %v438, %v436
    %v567 = vpack.c.b16 %v439, %v437
    %v568 = vpack.c.b16 %v442, %v440
    %v569 = vpack.c.b16 %v443, %v441
    %v570 = vpack.c.b16 %v446, %v444
    %v571 = vpack.c.b16 %v447, %v445
    %v572 = vpack.c.b16 %v450, %v448
    %v573 = vpack.c.b16 %v451, %v449
    %v574 = vpack.c.b16 %v454, %v452
    %v575 = vpack.c.b16 %v455, %v453
    %v576 = vpack.c.b16 %v458, %v456
    %v577 = vpack.c.b16 %v459, %v457
    %v578 = vpack.c.b16 %v462, %v460
    %v579 = vpack.c.b16 %v463, %v461
    %v580 = vpack.c.b16 %v466, %v464
    %v581 = vpack.c.b16 %v467, %v465
    %v582 = vpack.c.b16 %v470, %v468
    %v583 = vpack.c.b16 %v471, %v469
    %v584 = vpack.c.b16 %v474, %v472
    %v585 = vpack.c.b16 %v475, %v473
    %v586 = vpack.c.b16 %v478, %v476
    %v587 = vpack.c.b16 %v479, %v477
    %v588 = vpack.c.b16 %v482, %v480
    %v589 = vpack.c.b16 %v483, %v481
    %v590 = vpack.c.b16 %v486, %v484
    %v591 = vpack.c.b16 %v487, %v485
    %v592 = vpack.c.b16 %v490, %v488
    %v593 = vpack.c.b16 %v491, %v489
    %v594 = vpack.c.b16 %v494, %v492
    %v595 = vpack.c.b16 %v495, %v493
    %v596 = vpack.c.b16 %v498, %v496
    %v597 = vpack.c.b16 %v499, %v497
    %vm696 = vcmask 130048
    %v698 = vsel %vm696, %v95, 0
    %700 = vmatprep.subr.bf16.mxu0 %v501
    %701 = vmatpush1.bf16.msra.mxu0 %v500
    %702 = vmatprep.subr.bf16.mxu0 %v503
    %703 = vmatpush1.bf16.msra.mxu0 %v502
    %704 = vmatprep.subr.bf16.mxu0 %v505
    %705 = vmatpush1.bf16.msra.mxu0 %v504
    %706 = vmatprep.subr.bf16.mxu0 %v507
    %707 = vmatpush1.bf16.msra.mxu0 %v506
    %708 = vmatprep.subr.bf16.mxu0 %v509
    %709 = vmatpush1.bf16.msra.mxu0 %v508
    %710 = vmatprep.subr.bf16.mxu0 %v511
    %711 = vmatpush1.bf16.msra.mxu0 %v510
    %712 = vmatprep.subr.bf16.mxu0 %v513
    %713 = vmatpush1.bf16.msra.mxu0 %v512
    %714 = vmatprep.subr.bf16.mxu0 %v515
    %715 = vmatpush1.bf16.msra.mxu0 %v514
    %716 = vmatprep.subr.bf16.mxu0 %v517
    %717 = vmatpush1.bf16.msra.mxu0 %v516
    %718 = vmatprep.subr.bf16.mxu0 %v519
    %719 = vmatpush1.bf16.msra.mxu0 %v518
    %720 = vmatprep.subr.bf16.mxu0 %v521
    %721 = vmatpush1.bf16.msra.mxu0 %v520
    %722 = vmatprep.subr.bf16.mxu0 %v523
    %723 = vmatpush1.bf16.msra.mxu0 %v522
    %724 = vmatprep.subr.bf16.mxu0 %v525
    %725 = vmatpush1.bf16.msra.mxu0 %v524
    %726 = vmatprep.subr.bf16.mxu0 %v527
    %727 = vmatpush1.bf16.msra.mxu0 %v526
    %728 = vmatprep.subr.bf16.mxu0 %v529
    %729 = vmatpush1.bf16.msra.mxu0 %v528
    %730 = vmatprep.subr.bf16.mxu0 %v531
    %731 = vmatpush1.bf16.msra.mxu0 %v530
    %732 = vmatprep.mubr.bf16.mxu0 %v90
    %733 = vmatmul.mubr.bf16.gmra.mrb[0].mxu0 %v89
    %v734 = vpop.f32.mrb[0].mxu0
    %v735 = vadd.f32 %v199, %v734
    %v736 = vpop.f32.mrb[0].mxu0
    %v737 = vadd.f32 %v203, %v736
    %v738 = vpop.f32.mrb[0].mxu0
    %v739 = vadd.f32 %v199, %v738
    %v740 = vpop.f32.mrb[0].mxu0
    %v741 = vadd.f32 %v203, %v740
    %742 = vdwg.mxu0
    %743 = vmatprep.subr.bf16.mxu0 %v533
    %744 = vmatpush1.bf16.msra.mxu0 %v532
    %745 = vmatprep.subr.bf16.mxu0 %v535
    %746 = vmatpush1.bf16.msra.mxu0 %v534
    %747 = vmatprep.subr.bf16.mxu0 %v537
    %748 = vmatpush1.bf16.msra.mxu0 %v536
    %749 = vmatprep.subr.bf16.mxu0 %v539
    %750 = vmatpush1.bf16.msra.mxu0 %v538
    %751 = vmatprep.subr.bf16.mxu0 %v541
    %752 = vmatpush1.bf16.msra.mxu0 %v540
    %753 = vmatprep.subr.bf16.mxu0 %v543
    %754 = vmatpush1.bf16.msra.mxu0 %v542
    %755 = vmatprep.subr.bf16.mxu0 %v545
    %756 = vmatpush1.bf16.msra.mxu0 %v544
    %757 = vmatprep.subr.bf16.mxu0 %v547
    %758 = vmatpush1.bf16.msra.mxu0 %v546
    %759 = vmatprep.subr.bf16.mxu0 %v549
    %760 = vmatpush1.bf16.msra.mxu0 %v548
    %761 = vmatprep.subr.bf16.mxu0 %v551
    %762 = vmatpush1.bf16.msra.mxu0 %v550
    %763 = vmatprep.subr.bf16.mxu0 %v553
    %764 = vmatpush1.bf16.msra.mxu0 %v552
    %765 = vmatprep.subr.bf16.mxu0 %v555
    %766 = vmatpush1.bf16.msra.mxu0 %v554
    %767 = vmatprep.subr.bf16.mxu0 %v557
    %768 = vmatpush1.bf16.msra.mxu0 %v556
    %769 = vmatprep.subr.bf16.mxu0 %v559
    %770 = vmatpush1.bf16.msra.mxu0 %v558
    %771 = vmatprep.subr.bf16.mxu0 %v561
    %772 = vmatpush1.bf16.msra.mxu0 %v560
    %773 = vmatprep.subr.bf16.mxu0 %v563
    %774 = vmatpush1.bf16.msra.mxu0 %v562
    %775 = vmatprep.mubr.bf16.mxu0 %v92
    %776 = vmatmul.mubr.bf16.gmra.mrb[0].mxu0 %v91
    %v777 = vpop.f32.mrb[0].mxu0
    %v778 = vadd.f32 %v735, %v777
    %v779 = vpop.f32.mrb[0].mxu0
    %v780 = vadd.f32 %v737, %v779
    %v781 = vpop.f32.mrb[0].mxu0
    %v782 = vadd.f32 %v739, %v781
    %v783 = vpop.f32.mrb[0].mxu0
    %v784 = vadd.f32 %v741, %v783
    %785 = vdwg.mxu0
    %786 = vmatprep.subr.bf16.mxu0 %v565
    %787 = vmatpush1.bf16.msra.mxu0 %v564
    %788 = vmatprep.subr.bf16.mxu0 %v567
    %789 = vmatpush1.bf16.msra.mxu0 %v566
    %790 = vmatprep.subr.bf16.mxu0 %v569
    %791 = vmatpush1.bf16.msra.mxu0 %v568
    %792 = vmatprep.subr.bf16.mxu0 %v571
    %793 = vmatpush1.bf16.msra.mxu0 %v570
    %794 = vmatprep.subr.bf16.mxu0 %v573
    %795 = vmatpush1.bf16.msra.mxu0 %v572
    %796 = vmatprep.subr.bf16.mxu0 %v575
    %797 = vmatpush1.bf16.msra.mxu0 %v574
    %798 = vmatprep.subr.bf16.mxu0 %v577
    %799 = vmatpush1.bf16.msra.mxu0 %v576
    %800 = vmatprep.subr.bf16.mxu0 %v579
    %801 = vmatpush1.bf16.msra.mxu0 %v578
    %802 = vmatprep.subr.bf16.mxu0 %v581
    %803 = vmatpush1.bf16.msra.mxu0 %v580
    %804 = vmatprep.subr.bf16.mxu0 %v583
    %805 = vmatpush1.bf16.msra.mxu0 %v582
    %806 = vmatprep.subr.bf16.mxu0 %v585
    %807 = vmatpush1.bf16.msra.mxu0 %v584
    %808 = vmatprep.subr.bf16.mxu0 %v587
    %809 = vmatpush1.bf16.msra.mxu0 %v586
    %810 = vmatprep.subr.bf16.mxu0 %v589
    %811 = vmatpush1.bf16.msra.mxu0 %v588
    %812 = vmatprep.subr.bf16.mxu0 %v591
    %813 = vmatpush1.bf16.msra.mxu0 %v590
    %814 = vmatprep.subr.bf16.mxu0 %v593
    %815 = vmatpush1.bf16.msra.mxu0 %v592
    %816 = vmatprep.subr.bf16.mxu0 %v595
    %817 = vmatpush1.bf16.msra.mxu0 %v594
    %818 = vmatprep.mubr.bf16.mxu0 %v94
    %819 = vmatmul.mubr.bf16.gmra.mrb[0].mxu0 %v93
    %v820 = vpop.f32.mrb[0].mxu0
    %v821 = vadd.f32 %v778, %v820
    %v822 = vpop.f32.mrb[0].mxu0
    %v823 = vadd.f32 %v780, %v822
    %v824 = vpop.f32.mrb[0].mxu0
    %v825 = vadd.f32 %v782, %v824
    %v826 = vpop.f32.mrb[0].mxu0
    %v827 = vadd.f32 %v784, %v826
    %828 = vdwg.mxu0
    %829 = vmatprep.subr.bf16.mxu0 %v597
    %830 = vmatpush1.bf16.msra.mxu0 %v596
    %831 = vmatprep.subr.bf16.mxu0 0
    %832 = vmatpush1.bf16.msra.mxu0 0
    %833 = vmatprep.subr.bf16.mxu0 0
    %834 = vmatpush1.bf16.msra.mxu0 0
    %835 = vmatprep.subr.bf16.mxu0 0
    %836 = vmatpush1.bf16.msra.mxu0 0
    %837 = vmatprep.subr.bf16.mxu0 0
    %838 = vmatpush1.bf16.msra.mxu0 0
    %839 = vmatprep.subr.bf16.mxu0 0
    %840 = vmatpush1.bf16.msra.mxu0 0
    %841 = vmatprep.subr.bf16.mxu0 0
    %842 = vmatpush1.bf16.msra.mxu0 0
    %843 = vmatprep.subr.bf16.mxu0 0
    %844 = vmatpush1.bf16.msra.mxu0 0
    %845 = vmatprep.subr.bf16.mxu0 0
    %846 = vmatpush1.bf16.msra.mxu0 0
    %847 = vmatprep.subr.bf16.mxu0 0
    %848 = vmatpush1.bf16.msra.mxu0 0
    %849 = vmatprep.subr.bf16.mxu0 0
    %850 = vmatpush1.bf16.msra.mxu0 0
    %851 = vmatprep.subr.bf16.mxu0 0
    %852 = vmatpush1.bf16.msra.mxu0 0
    %853 = vmatprep.subr.bf16.mxu0 0
    %854 = vmatpush1.bf16.msra.mxu0 0
    %855 = vmatprep.subr.bf16.mxu0 0
    %856 = vmatpush1.bf16.msra.mxu0 0
    %857 = vmatprep.subr.bf16.mxu0 0
    %858 = vmatpush1.bf16.msra.mxu0 0
    %859 = vmatprep.subr.bf16.mxu0 0
    %860 = vmatpush1.bf16.msra.mxu0 0
    %861 = vmatprep.mubr.bf16.mxu0 0
    %862 = vmatmul.mubr.bf16.gmra.mrb[0].mxu0 %v698
    %v863 = vpop.f32.mrb[0].mxu0
    %v864 = vadd.f32 %v821, %v863
    %v865 = vpop.f32.mrb[0].mxu0
    %v866 = vadd.f32 %v823, %v865
    %v867 = vpop.f32.mrb[0].mxu0
    %v868 = vadd.f32 %v825, %v867
    %v869 = vpop.f32.mrb[0].mxu0
    %v870 = vadd.f32 %v827, %v869
    %871 = vdwg.mxu0
    %v872 = vmax.f32 %v864, 0.0
    %v873 = vmax.f32 %v866, 0.0
    %v874 = vmax.f32 %v868, 0.0
    %v875 = vmax.f32 %v870, 0.0
    %v876 = vpack.c.bf16 %v874, %v872
    %v877 = vpack.c.bf16 %v875, %v873
    %v878 = vld [vmem:[#allocation7] sm:$0xf]
    %v879 = vld [vmem:[#allocation7 + $0x4] sm:$0xf]
    %v880 = vld [vmem:[#allocation7 + $0x8] sm:$0xf]
    %v881 = vld [vmem:[#allocation7 + $0xc] sm:$0xf]
    %v882 = vld [vmem:[#allocation7 + $0x10] sm:$0xf]
    %v883 = vld [vmem:[#allocation7 + $0x14] sm:$0xf]
    %v884 = vld [vmem:[#allocation7 + $0x18] sm:$0xf]
    %v885 = vld [vmem:[#allocation7 + $0x1c] sm:$0xf]
    %v886 = vld [vmem:[#allocation7 + $0x20] sm:$0xf]
    %v887 = vld [vmem:[#allocation7 + $0x24] sm:$0xf]
    %v888 = vld [vmem:[#allocation7 + $0x28] sm:$0xf]
    %v889 = vld [vmem:[#allocation7 + $0x2c] sm:$0xf]
    %v890 = vld [vmem:[#allocation7 + $0x30] sm:$0xf]
    %v891 = vld [vmem:[#allocation7 + $0x34] sm:$0xf]
    %v892 = vld [vmem:[#allocation7 + $0x38] sm:$0xf]
    %v893 = vld [vmem:[#allocation7 + $0x3c] sm:$0xf]
    %v894 = vld [vmem:[#allocation7 + $0x40] sm:$0xf]
    %v895 = vld [vmem:[#allocation7 + $0x44] sm:$0xf]
    %v896 = vld [vmem:[#allocation7 + $0x48] sm:$0xf]
    %v897 = vld [vmem:[#allocation7 + $0x4c] sm:$0xf]
    %v898 = vld [vmem:[#allocation7 + $0x50] sm:$0xf]
    %v899 = vld [vmem:[#allocation7 + $0x54] sm:$0xf]
    %v900 = vld [vmem:[#allocation7 + $0x58] sm:$0xf]
    %v901 = vld [vmem:[#allocation7 + $0x5c] sm:$0xf]
    %v902 = vld [vmem:[#allocation7 + $0x60] sm:$0xf]
    %v903 = vld [vmem:[#allocation7 + $0x64] sm:$0xf]
    %v904 = vld [vmem:[#allocation7 + $0x68] sm:$0xf]
    %v905 = vld [vmem:[#allocation7 + $0x6c] sm:$0xf]
    %v906 = vld [vmem:[#allocation7 + $0x70] sm:$0xf]
    %v907 = vld [vmem:[#allocation7 + $0x74] sm:$0xf]
    %v908 = vld [vmem:[#allocation7 + $0x78] sm:$0xf]
    %v909 = vld [vmem:[#allocation7 + $0x7c] sm:$0xf]
    %v910 = vld [vmem:[%s4] sm:$0x1]
    %v912 = vlaneseq
    %v913 = vshrl.u32 %v912, 7
    %v914 = vsub.s32 0, %v913
    %v915 = vrot.slane %v910, %v914
    %v949 = vunpack.c.l.b16 %v878
    %v950 = vunpack.c.l.b16 %v879
    %v951 = vunpack.c.l.b16 %v880
    %v952 = vunpack.c.l.b16 %v881
    %v953 = vunpack.c.l.b16 %v882
    %v954 = vunpack.c.l.b16 %v883
    %v955 = vunpack.c.l.b16 %v884
    %v956 = vunpack.c.l.b16 %v885
    %v957 = vunpack.c.l.b16 %v886
    %v958 = vunpack.c.l.b16 %v887
    %v959 = vunpack.c.l.b16 %v888
    %v960 = vunpack.c.l.b16 %v889
    %v961 = vunpack.c.l.b16 %v890
    %v962 = vunpack.c.l.b16 %v891
    %v963 = vunpack.c.l.b16 %v892
    %v964 = vunpack.c.l.b16 %v893
    %v965 = vunpack.c.l.b16 %v894
    %v966 = vunpack.c.l.b16 %v895
    %v967 = vunpack.c.l.b16 %v896
    %v968 = vunpack.c.l.b16 %v897
    %v969 = vunpack.c.l.b16 %v898
    %v970 = vunpack.c.l.b16 %v899
    %v971 = vunpack.c.l.b16 %v900
    %v972 = vunpack.c.l.b16 %v901
    %v973 = vunpack.c.l.b16 %v902
    %v974 = vunpack.c.l.b16 %v903
    %v975 = vunpack.c.l.b16 %v904
    %v976 = vunpack.c.l.b16 %v905
    %v977 = vunpack.c.l.b16 %v906
    %v978 = vunpack.c.l.b16 %v907
    %v979 = vunpack.c.l.b16 %v908
    %v980 = vunpack.c.l.b16 %v909
    %v981 = vpack.c.b16 %v950, %v949
    %v982 = vpack.c.b16 %v952, %v951
    %v983 = vpack.c.b16 %v954, %v953
    %v984 = vpack.c.b16 %v956, %v955
    %v985 = vpack.c.b16 %v958, %v957
    %v986 = vpack.c.b16 %v960, %v959
    %v987 = vpack.c.b16 %v962, %v961
    %v988 = vpack.c.b16 %v964, %v963
    %v989 = vpack.c.b16 %v966, %v965
    %v990 = vpack.c.b16 %v968, %v967
    %v991 = vpack.c.b16 %v970, %v969
    %v992 = vpack.c.b16 %v972, %v971
    %v993 = vpack.c.b16 %v974, %v973
    %v994 = vpack.c.b16 %v976, %v975
    %v995 = vpack.c.b16 %v978, %v977
    %v996 = vpack.c.b16 %v980, %v979
    %1013 = vmatprep.subr.bf16.mxu0 0
    %1014 = vmatpush1.bf16.msra.mxu0 %v981
    %1015 = vmatprep.subr.bf16.mxu0 0
    %1016 = vmatpush1.bf16.msra.mxu0 %v982
    %1017 = vmatprep.subr.bf16.mxu0 0
    %1018 = vmatpush1.bf16.msra.mxu0 %v983
    %1019 = vmatprep.subr.bf16.mxu0 0
    %1020 = vmatpush1.bf16.msra.mxu0 %v984
    %1021 = vmatprep.subr.bf16.mxu0 0
    %1022 = vmatpush1.bf16.msra.mxu0 %v985
    %1023 = vmatprep.subr.bf16.mxu0 0
    %1024 = vmatpush1.bf16.msra.mxu0 %v986
    %1025 = vmatprep.subr.bf16.mxu0 0
    %1026 = vmatpush1.bf16.msra.mxu0 %v987
    %1027 = vmatprep.subr.bf16.mxu0 0
    %1028 = vmatpush1.bf16.msra.mxu0 %v988
    %1029 = vmatprep.subr.bf16.mxu0 0
    %1030 = vmatpush1.bf16.msra.mxu0 %v989
    %1031 = vmatprep.subr.bf16.mxu0 0
    %1032 = vmatpush1.bf16.msra.mxu0 %v990
    %1033 = vmatprep.subr.bf16.mxu0 0
    %1034 = vmatpush1.bf16.msra.mxu0 %v991
    %1035 = vmatprep.subr.bf16.mxu0 0
    %1036 = vmatpush1.bf16.msra.mxu0 %v992
    %1037 = vmatprep.subr.bf16.mxu0 0
    %1038 = vmatpush1.bf16.msra.mxu0 %v993
    %1039 = vmatprep.subr.bf16.mxu0 0
    %1040 = vmatpush1.bf16.msra.mxu0 %v994
    %1041 = vmatprep.subr.bf16.mxu0 0
    %1042 = vmatpush1.bf16.msra.mxu0 %v995
    %1043 = vmatprep.subr.bf16.mxu0 0
    %1044 = vmatpush1.bf16.msra.mxu0 %v996
    %1045 = vmatprep.mubr.bf16.mxu0 %v877
    %1046 = vmatmul.mubr.bf16.gmra.mrb[0].mxu0 %v876
    %v1047 = vpop.f32.mrb[0].mxu0
    %v1048 = vadd.f32 %v915, %v1047
    %v1049 = vpop.f32.mrb[0].mxu0
    %v1050 = vpop.f32.mrb[0].mxu0
    %v1051 = vadd.f32 %v915, %v1050
    %v1052 = vpop.f32.mrb[0].mxu0
    %1053 = vdwg.mxu0
    %v1054 = vmax.f32 %v1048, 0.0
    %v1055 = vmax.f32 %v1051, 0.0
    %v1056 = vpack.c.bf16 %v1055, %v1054
    %v1057 = vld [vmem:[%s5] sm:$0xf]
    %v1058 = vld [vmem:[%s5 + $0x4] sm:$0xf]
    %v1059 = vld [vmem:[%s5 + $0x8] sm:$0xf]
    %v1060 = vld [vmem:[%s5 + $0xc] sm:$0xf]
    %v1061 = vld [vmem:[%s5 + $0x10] sm:$0xf]
    %v1062 = vld [vmem:[%s5 + $0x14] sm:$0xf]
    %v1063 = vld [vmem:[%s5 + $0x18] sm:$0xf]
    %v1064 = vld [vmem:[%s5 + $0x1c] sm:$0xf]
    %v1065 = vld [vmem:[%s5 + $0x20] sm:$0xf]
    %v1066 = vld [vmem:[%s5 + $0x24] sm:$0xf]
    %v1067 = vld [vmem:[%s5 + $0x28] sm:$0xf]
    %v1068 = vld [vmem:[%s5 + $0x2c] sm:$0xf]
    %v1069 = vld [vmem:[%s5 + $0x30] sm:$0xf]
    %v1070 = vld [vmem:[%s5 + $0x34] sm:$0xf]
    %v1071 = vld [vmem:[%s5 + $0x38] sm:$0xf]
    %v1072 = vld [vmem:[%s5 + $0x3c] sm:$0xf]
    %v1073 = vld [vmem:[%s6] sm:$0x1]
    %v1075 = vlaneseq
    %v1076 = vshrl.u32 %v1075, 7
    %v1077 = vsub.s32 0, %v1076
    %v1078 = vrot.slane %v1073, %v1077
    %v1096 = vunpack.c.l.b16 %v1057
    %v1097 = vunpack.c.l.b16 %v1058
    %v1098 = vunpack.c.l.b16 %v1059
    %v1099 = vunpack.c.l.b16 %v1060
    %v1100 = vunpack.c.l.b16 %v1061
    %v1101 = vunpack.c.l.b16 %v1062
    %v1102 = vunpack.c.l.b16 %v1063
    %v1103 = vunpack.c.l.b16 %v1064
    %v1104 = vunpack.c.l.b16 %v1065
    %v1105 = vunpack.c.l.b16 %v1066
    %v1106 = vunpack.c.l.b16 %v1067
    %v1107 = vunpack.c.l.b16 %v1068
    %v1108 = vunpack.c.l.b16 %v1069
    %v1109 = vunpack.c.l.b16 %v1070
    %v1110 = vunpack.c.l.b16 %v1071
    %v1111 = vunpack.c.l.b16 %v1072
    %v1112 = vpack.c.b16 %v1097, %v1096
    %v1113 = vpack.c.b16 %v1099, %v1098
    %v1114 = vpack.c.b16 %v1101, %v1100
    %v1115 = vpack.c.b16 %v1103, %v1102
    %v1116 = vpack.c.b16 %v1105, %v1104
    %v1117 = vpack.c.b16 %v1107, %v1106
    %v1118 = vpack.c.b16 %v1109, %v1108
    %v1119 = vpack.c.b16 %v1111, %v1110
    %1128 = vmatprep.subr.bf16.mxu0 0
    %1129 = vmatpush1.bf16.msra.mxu0 %v1112
    %1130 = vmatprep.subr.bf16.mxu0 0
    %1131 = vmatpush1.bf16.msra.mxu0 %v1113
    %1132 = vmatprep.subr.bf16.mxu0 0
    %1133 = vmatpush1.bf16.msra.mxu0 %v1114
    %1134 = vmatprep.subr.bf16.mxu0 0
    %1135 = vmatpush1.bf16.msra.mxu0 %v1115
    %1136 = vmatprep.subr.bf16.mxu0 0
    %1137 = vmatpush1.bf16.msra.mxu0 %v1116
    %1138 = vmatprep.subr.bf16.mxu0 0
    %1139 = vmatpush1.bf16.msra.mxu0 %v1117
    %1140 = vmatprep.subr.bf16.mxu0 0
    %1141 = vmatpush1.bf16.msra.mxu0 %v1118
    %1142 = vmatprep.subr.bf16.mxu0 0
    %1143 = vmatpush1.bf16.msra.mxu0 %v1119
    %1144 = vmatprep.subr.bf16.mxu0 0
    %1145 = vmatpush1.bf16.msra.mxu0 0
    %1146 = vmatprep.subr.bf16.mxu0 0
    %1147 = vmatpush1.bf16.msra.mxu0 0
    %1148 = vmatprep.subr.bf16.mxu0 0
    %1149 = vmatpush1.bf16.msra.mxu0 0
    %1150 = vmatprep.subr.bf16.mxu0 0
    %1151 = vmatpush1.bf16.msra.mxu0 0
    %1152 = vmatprep.subr.bf16.mxu0 0
    %1153 = vmatpush1.bf16.msra.mxu0 0
    %1154 = vmatprep.subr.bf16.mxu0 0
    %1155 = vmatpush1.bf16.msra.mxu0 0
    %1156 = vmatprep.subr.bf16.mxu0 0
    %1157 = vmatpush1.bf16.msra.mxu0 0
    %1158 = vmatprep.subr.bf16.mxu0 0
    %1159 = vmatpush1.bf16.msra.mxu0 0
    %1160 = vmatprep.mubr.bf16.mxu0 0
    %1161 = vmatmul.mubr.bf16.gmra.mrb[0].mxu0 %v1056
    %v1162 = vpop.f32.mrb[0].mxu0
    %v1163 = vadd.f32 %v1078, %v1162
    %v1164 = vpop.f32.mrb[0].mxu0
    %v1165 = vpop.f32.mrb[0].mxu0
    %v1166 = vadd.f32 %v1078, %v1165
    %v1167 = vpop.f32.mrb[0].mxu0
    %1168 = vdwg.mxu0
    %v1169 = vmax.f32 %v1163, 0.0
    %v1170 = vmax.f32 %v1166, 0.0
    %v1171 = vpack.c.bf16 %v1170, %v1169
    %v1172 = vld [vmem:[%s7] sm:$0xf]
    %v1173 = vld [vmem:[%s7 + $0x4] sm:$0xf]
    %v1174 = vld [vmem:[%s7 + $0x8] sm:$0xf]
    %v1175 = vld [vmem:[%s7 + $0xc] sm:$0xf]
    %v1176 = vld [vmem:[%s7 + $0x10] sm:$0xf]
    %v1177 = vld [vmem:[%s7 + $0x14] sm:$0xf]
    %v1178 = vld [vmem:[%s7 + $0x18] sm:$0xf]
    %v1179 = vld [vmem:[%s7 + $0x1c] sm:$0xf]
    %v1180 = vld [vmem:[%s8] sm:$0x1]
    %v1182 = vlaneseq
    %v1183 = vshrl.u32 %v1182, 7
    %v1184 = vsub.s32 0, %v1183
    %v1185 = vrot.slane %v1180, %v1184
    %v1195 = vunpack.c.l.b16 %v1172
    %v1196 = vunpack.c.l.b16 %v1173
    %v1197 = vunpack.c.l.b16 %v1174
    %v1198 = vunpack.c.l.b16 %v1175
    %v1199 = vunpack.c.l.b16 %v1176
    %v1200 = vunpack.c.l.b16 %v1177
    %v1201 = vunpack.c.l.b16 %v1178
    %v1202 = vunpack.c.l.b16 %v1179
    %v1203 = vpack.c.b16 %v1196, %v1195
    %v1204 = vpack.c.b16 %v1198, %v1197
    %v1205 = vpack.c.b16 %v1200, %v1199
    %v1206 = vpack.c.b16 %v1202, %v1201
    %vm1211 = vcmask 523264
    %v1213 = vsel %vm1211, %v1171, 0
    %1215 = vmatprep.subr.bf16.mxu0 0
    %1216 = vmatpush1.bf16.msra.mxu0 %v1203
    %1217 = vmatprep.subr.bf16.mxu0 0
    %1218 = vmatpush1.bf16.msra.mxu0 %v1204
    %1219 = vmatprep.subr.bf16.mxu0 0
    %1220 = vmatpush1.bf16.msra.mxu0 %v1205
    %1221 = vmatprep.subr.bf16.mxu0 0
    %1222 = vmatpush1.bf16.msra.mxu0 %v1206
    %1223 = vmatprep.subr.bf16.mxu0 0
    %1224 = vmatpush1.bf16.msra.mxu0 0
    %1225 = vmatprep.subr.bf16.mxu0 0
    %1226 = vmatpush1.bf16.msra.mxu0 0
    %1227 = vmatprep.subr.bf16.mxu0 0
    %1228 = vmatpush1.bf16.msra.mxu0 0
    %1229 = vmatprep.subr.bf16.mxu0 0
    %1230 = vmatpush1.bf16.msra.mxu0 0
    %1231 = vmatprep.subr.bf16.mxu0 0
    %1232 = vmatpush1.bf16.msra.mxu0 0
    %1233 = vmatprep.subr.bf16.mxu0 0
    %1234 = vmatpush1.bf16.msra.mxu0 0
    %1235 = vmatprep.subr.bf16.mxu0 0
    %1236 = vmatpush1.bf16.msra.mxu0 0
    %1237 = vmatprep.subr.bf16.mxu0 0
    %1238 = vmatpush1.bf16.msra.mxu0 0
    %1239 = vmatprep.subr.bf16.mxu0 0
    %1240 = vmatpush1.bf16.msra.mxu0 0
    %1241 = vmatprep.subr.bf16.mxu0 0
    %1242 = vmatpush1.bf16.msra.mxu0 0
    %1243 = vmatprep.subr.bf16.mxu0 0
    %1244 = vmatpush1.bf16.msra.mxu0 0
    %1245 = vmatprep.subr.bf16.mxu0 0
    %1246 = vmatpush1.bf16.msra.mxu0 0
    %1247 = vmatprep.mubr.bf16.mxu0 0
    %1248 = vmatmul.mubr.bf16.gmra.mrb[0].mxu0 %v1213
    %v1249 = vpop.f32.mrb[0].mxu0
    %v1250 = vadd.f32 %v1185, %v1249
    %v1251 = vpop.f32.mrb[0].mxu0
    %v1252 = vpop.f32.mrb[0].mxu0
    %v1253 = vadd.f32 %v1185, %v1252
    %v1254 = vpop.f32.mrb[0].mxu0
    %1255 = vdwg.mxu0
    %1256 = vmax.xlane.f32.xlu0 %v1250
    %v1257 = vpop.xlane.xlu0 %1256
    %1258 = vmax.xlane.f32.xlu0 %v1253
    %v1259 = vpop.xlane.xlu0 %1258
    %v1260 = vsub.f32 %v1250, %v1257
    %v1261 = vsub.f32 %v1253, %v1259
    %v1262 = vmul.f32 %v1260, 1.442695
    %v1263 = vpow.pop %v1262
    %v1264 = vmul.f32 %v1261, 1.442695
    %v1265 = vpow.pop %v1264
    %1266 = vadd.xlane.f32.xlu0 %v1263
    %v1267 = vpop.xlane.xlu0 %1266
    %1268 = vadd.xlane.f32.xlu0 %v1265
    %v1269 = vpop.xlane.xlu0 %1268
    %v1270 = vlog2.pop %v1267
    %v1271 = vmul.f32 %v1270, 0.6931472
    %v1272 = vlog2.pop %v1269
    %v1273 = vmul.f32 %v1272, 0.6931472
    %v1274 = vsub.f32 %v1260, %v1271
    %v1275 = vsub.f32 %v1261, %v1273
    %v1276 = vpack.c.bf16 %v1275, %v1274
    %v1278 = vunpack.c.l.b16 %v1276
    %v1279 = vunpack.c.h.b16 %v1276
    %v1280 = vpack.c.b16 %v1278, %v1278
    %v1281 = vpack.c.b16 %v1279, %v1279
    %1284 = vst [vmem:[#allocation8] sm:$0xf] %v1280
    %1285 = vst [vmem:[#allocation8 + $0x4] sm:$0xf] %v1281
    // Predicated region
    $region50: #{tpu_custom_call.1} parent=1 // pred_check
      _
    $region51: #{tpu_custom_call.1} parent=1 // pred_check_branch
      %1287 = sbr.rel (0) target = $region53
    $region52: #{tpu_custom_call.1} parent=1 // pred_region
      %s1289 = ssub.s32 128, 128
      %1290 = vsyncadd [#allocation4], %s1289
      %s1291 = sshll.u32 [#allocation8], 4
      %s1292 = int_to_ptr.vmem [resolvable:$true] %s1291
      %1297 = dma.vmem_to_hbm [thread:$0]  %s1292, 128, %s9, [#allocation4], 64, 64, 4
    $region53: #{tpu_custom_call.1} parent=1 // pred_fallthru
      _
    // Predicated region
    $region54: #{tpu_custom_call.1} parent=1 // pred_check
      _
    $region55: #{tpu_custom_call.1} parent=1 // pred_check_branch
      %1299 = sbr.rel (0) target = $region57
    $region56: #{tpu_custom_call.1} parent=1 // pred_region
      %1300 = dma.done [#allocation4], 128
    $region57: #{tpu_custom_call.1} parent=1 // pred_fallthru
      _
    %1301 = vsyncpa [#allocation3], 1
    %1302 = vsyncpa [#allocation6], 1
    %1303 = vsyncpa [#allocation4], 1

</llo_original>
